<compile_context>
chip_gen: v5e
topology: v5e:2x2
jax: 0.10.0
libtpu: 0.0.40
codegen_flags: <defaults>
</compile_context>

<pallas_src>
import functools

import numpy as np

import jax
import jax.numpy as jnp
from jax.experimental import pallas as pl
from jax.experimental.pallas import tpu as pltpu

BN_EPS = 1e-5


# ----------------------------- fused kernel -----------------------------

def _deep_characteristics_kernel(dims, activation_type, z_ref, w_ref, p_ref, out_ref):
    """Fused forward for the whole DenseBlock stack.

    z_ref  : (B, Cin0)            input activations, B = N*M (lane axis after layer 0)
    w_ref  : (L, Cmax, Cmax)      zero-padded PyTorch-layout Linear weights
    p_ref  : (L, Cmax, 3)         packed [bias | bn_weight | bn_bias], zero-padded
    out_ref: (B, Cout_last)
    """
    n_layers = len(dims) - 1
    cin0 = dims[0]
    out_c = dims[-1]

    b_size = z_ref.shape[0]
    inv_b = 1.0 / float(b_size)

    x = None  # activations in (C, B) layout after each layer
    for l in range(n_layers):
        w = w_ref[l]                       # (Cmax, Cmax)
        p = p_ref[l]                       # (Cmax, 3)
        bias = p[:, 0:1]                   # (Cmax, 1)
        bn_w = p[:, 1:2]
        bn_b = p[:, 2:3]

        if l == 0:
            # h = W @ Z^T  via trans-B contraction; keeps batch on the lane axis with no
            # wrapper-side transpose.
            z = z_ref[...]                 # (B, Cin0)
            h = jax.lax.dot_general(
                w[:, :cin0], z,
                dimension_numbers=(((1,), (1,)), ((), ())),
                preferred_element_type=jnp.float32,
            ) + bias                       # (Cmax, B)
        else:
            h = jnp.dot(w, x, preferred_element_type=jnp.float32) + bias

        # Activation.
        if activation_type == "relu":
            h = jnp.maximum(h, 0.0)
        elif activation_type == "lrelu":
            h = jnp.where(h >= 0.0, h, 0.01 * h)
        elif activation_type != "linear":
            raise NotImplementedError(f"activation `{activation_type}`")

        # BatchNorm1d (training mode, biased variance) over the flattened N*M batch
        # (lane axis). Two independent cross-lane reductions; affine folded to one FMA.
        s = jnp.sum(h, axis=1, keepdims=True)           # (Cmax, 1)
        ss = jnp.sum(h * h, axis=1, keepdims=True)      # (Cmax, 1), independent of `s`
        mean = s * inv_b
        var = ss * inv_b - mean * mean                  # biased variance
        scale = jax.lax.rsqrt(var + BN_EPS) * bn_w
        shift = bn_b - mean * scale
        x = h * scale + shift                           # (Cmax, B)

    # One in-kernel transpose so the wrapper only does a contiguous (free) reshape.
    xt = x.T                                            # (B, Cmax)
    out_ref[...] = xt[:, :out_c].astype(out_ref.dtype)  # (B, Cout_last)


# ----------------------------- wrapper -----------------------------

@functools.partial(jax.jit, static_argnames=("dims", "activation_type"))
def deep_characteristics_forward(w_stack, p_stack, Z, *, dims, activation_type="relu"):
    """w_stack: (L, Cmax, Cmax), p_stack: (L, Cmax, 3), Z: (N, M, in_channels)."""
    N, M, K = Z.shape
    assert K == dims[0]
    B = N * M
    out_c = dims[-1]

    z2 = Z.reshape(B, K).astype(jnp.float32)            # contiguous reshape, no transpose

    kernel = functools.partial(_deep_characteristics_kernel, dims, activation_type)
    vmem_spec = pl.BlockSpec(memory_space=pltpu.MemorySpace.VMEM)

    y = pl.pallas_call(
        kernel,
        out_shape=jax.ShapeDtypeStruct((B, out_c), jnp.float32),
        in_specs=[vmem_spec, vmem_spec, vmem_spec],
        out_specs=vmem_spec,
    )(z2, w_stack, p_stack)

    return y.reshape(N, M, out_c)                       # contiguous reshape, no transpose


# ----------------------------- params / packing / reference -----------------------------

def init_params(key, n_layers, in_channels, out_channels, features):
    dims = [in_channels] + [features] * (n_layers - 1) + [out_channels]
    params = []
    for l in range(n_layers):
        cin, cout = dims[l], dims[l + 1]
        key, kw, kb = jax.random.split(key, 3)
        bound = 1.0 / float(np.sqrt(cin))
        w = jax.random.uniform(kw, (cout, cin), jnp.float32, -bound, bound)  # PyTorch (out, in)
        b = jax.random.uniform(kb, (cout,), jnp.float32, -bound, bound)
        bn_w = jnp.ones((cout,), jnp.float32)    # BatchNorm1d default affine init
        bn_b = jnp.zeros((cout,), jnp.float32)
        params.append((w, b, bn_w, bn_b))
    return params, tuple(dims)


def pack_params(params, dims):
    """One-time prep (numpy, no per-forward XLA launches): zero-padded stacked params."""
    n_layers = len(params)
    cmax = max(dims)
    w_np = np.zeros((n_layers, cmax, cmax), np.float32)
    p_np = np.zeros((n_layers, cmax, 3), np.float32)
    for l, (w, b, bn_w, bn_b) in enumerate(params):
        co, ci = w.shape
        w_np[l, :co, :ci] = np.asarray(w, np.float32)
        p_np[l, :co, 0] = np.asarray(b, np.float32)
        p_np[l, :co, 1] = np.asarray(bn_w, np.float32)
        p_np[l, :co, 2] = np.asarray(bn_b, np.float32)
    return jnp.asarray(w_np), jnp.asarray(p_np)


def reference_forward(params, Z, activation_type="relu"):
    """Pure-JAX reference mirroring the PyTorch module (training-mode BatchNorm1d)."""
    N, M, _ = Z.shape
    x = Z.reshape(N * M, -1)
    for (w, b, bn_w, bn_b) in params:
        h = x @ w.T + b[None, :]
        if activation_type == "relu":
            h = jnp.maximum(h, 0.0)
        elif activation_type == "lrelu":
            h = jnp.where(h >= 0.0, h, 0.01 * h)
        mean = h.mean(axis=0, keepdims=True)
        var = ((h - mean) ** 2).mean(axis=0, keepdims=True)   # biased, like BN normalization
        x = (h - mean) / jnp.sqrt(var + BN_EPS) * bn_w[None, :] + bn_b[None, :]
    return x.reshape(N, M, -1)


# ----------------------------- main -----------------------------

if __name__ == "__main__":
    # Small shapes: batch N = 4, stocks M = 32 (flattened BN batch = 128 = one full lane
    # width), in_channels = 8, features = 32, out_channels = 4, n_layers = 3.
    N, M = 4, 32
    n_layers, in_channels, features, out_channels = 3, 8, 32, 4

    key = jax.random.PRNGKey(0)
    key, kz, kp = jax.random.split(key, 3)
    Z = jax.random.normal(kz, (N, M, in_channels), jnp.float32)
    params, dims = init_params(kp, n_layers, in_channels, out_channels, features)

    # One-time parameter packing (outside the forward path).
    w_stack, p_stack = pack_params(params, dims)

    Y = deep_characteristics_forward(w_stack, p_stack, Z, dims=dims, activation_type="relu")
    Y = jax.block_until_ready(Y)

    Y_ref = reference_forward(params, Z, activation_type="relu")
    max_diff = float(jnp.max(jnp.abs(Y - Y_ref)))
    assert Y.shape == (N, M, out_channels)
    assert bool(jnp.isfinite(Y).all())
    assert max_diff < 1e-2, f"mismatch vs reference: {max_diff}"

    print("KERNEL_OK")
</pallas_src>

<mosaic_0001>
module attributes {stable_mosaic.version = 11 : i64} {
  func.func @_deep_characteristics_kernel(%arg0: memref<128x8xf32, #tpu.memory_space<vmem>>, %arg1: memref<3x32x32xf32, #tpu.memory_space<vmem>>, %arg2: memref<3x32x3xf32, #tpu.memory_space<vmem>>, %arg3: memref<128x4xf32, #tpu.memory_space<vmem>>) attributes {dimension_semantics = [], scalar_prefetch = 0 : i64, scratch_operands = 0 : i64, tpu.core_type = #tpu.core_type<tc>} {
    %c0 = arith.constant 0 : index
    %c0_0 = arith.constant 0 : index
    %c0_1 = arith.constant 0 : index
    %0 = vector.load %arg1[%c0, %c0_0, %c0_1] : memref<3x32x32xf32, #tpu.memory_space<vmem>>, vector<1x32x32xf32>
    %1 = vector.shape_cast %0 : vector<1x32x32xf32> to vector<32x32xf32>
    %c0_2 = arith.constant 0 : index
    %c0_3 = arith.constant 0 : index
    %c0_4 = arith.constant 0 : index
    %2 = vector.load %arg2[%c0_2, %c0_3, %c0_4] : memref<3x32x3xf32, #tpu.memory_space<vmem>>, vector<1x32x3xf32>
    %3 = vector.shape_cast %2 : vector<1x32x3xf32> to vector<32x3xf32>
    %4 = vector.extract_strided_slice %3 {offsets = [0, 0], sizes = [32, 1], strides = [1, 1]} : vector<32x3xf32> to vector<32x1xf32>
    %5 = vector.extract_strided_slice %3 {offsets = [0, 1], sizes = [32, 1], strides = [1, 1]} : vector<32x3xf32> to vector<32x1xf32>
    %6 = vector.extract_strided_slice %3 {offsets = [0, 2], sizes = [32, 1], strides = [1, 1]} : vector<32x3xf32> to vector<32x1xf32>
    %c0_5 = arith.constant 0 : index
    %c0_6 = arith.constant 0 : index
    %7 = vector.load %arg0[%c0_5, %c0_6] : memref<128x8xf32, #tpu.memory_space<vmem>>, vector<128x8xf32>
    %8 = vector.extract_strided_slice %1 {offsets = [0, 0], sizes = [32, 8], strides = [1, 1]} : vector<32x32xf32> to vector<32x8xf32>
    %cst = arith.constant dense<0.000000e+00> : vector<32x128xf32>
    %9 = tpu.matmul %8, %7, %cst {dimension_numbers = #tpu.dot_dimension_numbers<[1], [1], [0], [0], [0, 0, 1, 0], [], []>} : vector<32x8xf32>, vector<128x8xf32>, vector<32x128xf32> -> vector<32x128xf32>
    %10 = vector.broadcast %4 : vector<32x1xf32> to vector<32x128xf32>
    %11 = arith.addf %9, %10 : vector<32x128xf32>
    %cst_7 = arith.constant 0.000000e+00 : f32
    %12 = vector.broadcast %cst_7 : f32 to vector<32x128xf32>
    %13 = arith.maximumf %11, %12 : vector<32x128xf32>
    %cst_8 = arith.constant dense<0.000000e+00> : vector<32xf32>
    %14 = vector.multi_reduction <add>, %13, %cst_8 [1] : vector<32x128xf32> to vector<32xf32>
    %15 = vector.shape_cast %14 : vector<32xf32> to vector<32x1xf32>
    %16 = arith.mulf %13, %13 : vector<32x128xf32>
    %cst_9 = arith.constant dense<0.000000e+00> : vector<32xf32>
    %17 = vector.multi_reduction <add>, %16, %cst_9 [1] : vector<32x128xf32> to vector<32xf32>
    %18 = vector.shape_cast %17 : vector<32xf32> to vector<32x1xf32>
    %cst_10 = arith.constant 7.812500e-03 : f32
    %19 = vector.broadcast %cst_10 : f32 to vector<32x1xf32>
    %20 = arith.mulf %15, %19 : vector<32x1xf32>
    %cst_11 = arith.constant 7.812500e-03 : f32
    %21 = vector.broadcast %cst_11 : f32 to vector<32x1xf32>
    %22 = arith.mulf %18, %21 : vector<32x1xf32>
    %23 = arith.mulf %20, %20 : vector<32x1xf32>
    %24 = arith.subf %22, %23 : vector<32x1xf32>
    %cst_12 = arith.constant 9.99999974E-6 : f32
    %25 = vector.broadcast %cst_12 : f32 to vector<32x1xf32>
    %26 = arith.addf %24, %25 : vector<32x1xf32>
    %27 = math.rsqrt %26 : vector<32x1xf32>
    %28 = arith.mulf %27, %5 : vector<32x1xf32>
    %29 = arith.mulf %20, %28 : vector<32x1xf32>
    %30 = arith.subf %6, %29 : vector<32x1xf32>
    %31 = vector.broadcast %28 : vector<32x1xf32> to vector<32x128xf32>
    %32 = arith.mulf %13, %31 : vector<32x128xf32>
    %33 = vector.broadcast %30 : vector<32x1xf32> to vector<32x128xf32>
    %34 = arith.addf %32, %33 : vector<32x128xf32>
    %c1 = arith.constant 1 : index
    %c0_13 = arith.constant 0 : index
    %c0_14 = arith.constant 0 : index
    %35 = vector.load %arg1[%c1, %c0_13, %c0_14] : memref<3x32x32xf32, #tpu.memory_space<vmem>>, vector<1x32x32xf32>
    %36 = vector.shape_cast %35 : vector<1x32x32xf32> to vector<32x32xf32>
    %c1_15 = arith.constant 1 : index
    %c0_16 = arith.constant 0 : index
    %c0_17 = arith.constant 0 : index
    %37 = vector.load %arg2[%c1_15, %c0_16, %c0_17] : memref<3x32x3xf32, #tpu.memory_space<vmem>>, vector<1x32x3xf32>
    %38 = vector.shape_cast %37 : vector<1x32x3xf32> to vector<32x3xf32>
    %39 = vector.extract_strided_slice %38 {offsets = [0, 0], sizes = [32, 1], strides = [1, 1]} : vector<32x3xf32> to vector<32x1xf32>
    %40 = vector.extract_strided_slice %38 {offsets = [0, 1], sizes = [32, 1], strides = [1, 1]} : vector<32x3xf32> to vector<32x1xf32>
    %41 = vector.extract_strided_slice %38 {offsets = [0, 2], sizes = [32, 1], strides = [1, 1]} : vector<32x3xf32> to vector<32x1xf32>
    %cst_18 = arith.constant dense<0.000000e+00> : vector<32x128xf32>
    %42 = tpu.matmul %36, %34, %cst_18 {dimension_numbers = #tpu.dot_dimension_numbers<[1], [0], [0], [1], [0, 0, 1, 1], [], []>} : vector<32x32xf32>, vector<32x128xf32>, vector<32x128xf32> -> vector<32x128xf32>
    %43 = vector.broadcast %39 : vector<32x1xf32> to vector<32x128xf32>
    %44 = arith.addf %42, %43 : vector<32x128xf32>
    %cst_19 = arith.constant 0.000000e+00 : f32
    %45 = vector.broadcast %cst_19 : f32 to vector<32x128xf32>
    %46 = arith.maximumf %44, %45 : vector<32x128xf32>
    %cst_20 = arith.constant dense<0.000000e+00> : vector<32xf32>
    %47 = vector.multi_reduction <add>, %46, %cst_20 [1] : vector<32x128xf32> to vector<32xf32>
    %48 = vector.shape_cast %47 : vector<32xf32> to vector<32x1xf32>
    %49 = arith.mulf %46, %46 : vector<32x128xf32>
    %cst_21 = arith.constant dense<0.000000e+00> : vector<32xf32>
    %50 = vector.multi_reduction <add>, %49, %cst_21 [1] : vector<32x128xf32> to vector<32xf32>
    %51 = vector.shape_cast %50 : vector<32xf32> to vector<32x1xf32>
    %cst_22 = arith.constant 7.812500e-03 : f32
    %52 = vector.broadcast %cst_22 : f32 to vector<32x1xf32>
    %53 = arith.mulf %48, %52 : vector<32x1xf32>
    %cst_23 = arith.constant 7.812500e-03 : f32
    %54 = vector.broadcast %cst_23 : f32 to vector<32x1xf32>
    %55 = arith.mulf %51, %54 : vector<32x1xf32>
    %56 = arith.mulf %53, %53 : vector<32x1xf32>
    %57 = arith.subf %55, %56 : vector<32x1xf32>
    %cst_24 = arith.constant 9.99999974E-6 : f32
    %58 = vector.broadcast %cst_24 : f32 to vector<32x1xf32>
    %59 = arith.addf %57, %58 : vector<32x1xf32>
    %60 = math.rsqrt %59 : vector<32x1xf32>
    %61 = arith.mulf %60, %40 : vector<32x1xf32>
    %62 = arith.mulf %53, %61 : vector<32x1xf32>
    %63 = arith.subf %41, %62 : vector<32x1xf32>
    %64 = vector.broadcast %61 : vector<32x1xf32> to vector<32x128xf32>
    %65 = arith.mulf %46, %64 : vector<32x128xf32>
    %66 = vector.broadcast %63 : vector<32x1xf32> to vector<32x128xf32>
    %67 = arith.addf %65, %66 : vector<32x128xf32>
    %c2 = arith.constant 2 : index
    %c0_25 = arith.constant 0 : index
    %c0_26 = arith.constant 0 : index
    %68 = vector.load %arg1[%c2, %c0_25, %c0_26] : memref<3x32x32xf32, #tpu.memory_space<vmem>>, vector<1x32x32xf32>
    %69 = vector.shape_cast %68 : vector<1x32x32xf32> to vector<32x32xf32>
    %c2_27 = arith.constant 2 : index
    %c0_28 = arith.constant 0 : index
    %c0_29 = arith.constant 0 : index
    %70 = vector.load %arg2[%c2_27, %c0_28, %c0_29] : memref<3x32x3xf32, #tpu.memory_space<vmem>>, vector<1x32x3xf32>
    %71 = vector.shape_cast %70 : vector<1x32x3xf32> to vector<32x3xf32>
    %72 = vector.extract_strided_slice %71 {offsets = [0, 0], sizes = [32, 1], strides = [1, 1]} : vector<32x3xf32> to vector<32x1xf32>
    %73 = vector.extract_strided_slice %71 {offsets = [0, 1], sizes = [32, 1], strides = [1, 1]} : vector<32x3xf32> to vector<32x1xf32>
    %74 = vector.extract_strided_slice %71 {offsets = [0, 2], sizes = [32, 1], strides = [1, 1]} : vector<32x3xf32> to vector<32x1xf32>
    %cst_30 = arith.constant dense<0.000000e+00> : vector<32x128xf32>
    %75 = tpu.matmul %69, %67, %cst_30 {dimension_numbers = #tpu.dot_dimension_numbers<[1], [0], [0], [1], [0, 0, 1, 1], [], []>} : vector<32x32xf32>, vector<32x128xf32>, vector<32x128xf32> -> vector<32x128xf32>
    %76 = vector.broadcast %72 : vector<32x1xf32> to vector<32x128xf32>
    %77 = arith.addf %75, %76 : vector<32x128xf32>
    %cst_31 = arith.constant 0.000000e+00 : f32
    %78 = vector.broadcast %cst_31 : f32 to vector<32x128xf32>
    %79 = arith.maximumf %77, %78 : vector<32x128xf32>
    %cst_32 = arith.constant dense<0.000000e+00> : vector<32xf32>
    %80 = vector.multi_reduction <add>, %79, %cst_32 [1] : vector<32x128xf32> to vector<32xf32>
    %81 = vector.shape_cast %80 : vector<32xf32> to vector<32x1xf32>
    %82 = arith.mulf %79, %79 : vector<32x128xf32>
    %cst_33 = arith.constant dense<0.000000e+00> : vector<32xf32>
    %83 = vector.multi_reduction <add>, %82, %cst_33 [1] : vector<32x128xf32> to vector<32xf32>
    %84 = vector.shape_cast %83 : vector<32xf32> to vector<32x1xf32>
    %cst_34 = arith.constant 7.812500e-03 : f32
    %85 = vector.broadcast %cst_34 : f32 to vector<32x1xf32>
    %86 = arith.mulf %81, %85 : vector<32x1xf32>
    %cst_35 = arith.constant 7.812500e-03 : f32
    %87 = vector.broadcast %cst_35 : f32 to vector<32x1xf32>
    %88 = arith.mulf %84, %87 : vector<32x1xf32>
    %89 = arith.mulf %86, %86 : vector<32x1xf32>
    %90 = arith.subf %88, %89 : vector<32x1xf32>
    %cst_36 = arith.constant 9.99999974E-6 : f32
    %91 = vector.broadcast %cst_36 : f32 to vector<32x1xf32>
    %92 = arith.addf %90, %91 : vector<32x1xf32>
    %93 = math.rsqrt %92 : vector<32x1xf32>
    %94 = arith.mulf %93, %73 : vector<32x1xf32>
    %95 = arith.mulf %86, %94 : vector<32x1xf32>
    %96 = arith.subf %74, %95 : vector<32x1xf32>
    %97 = vector.broadcast %94 : vector<32x1xf32> to vector<32x128xf32>
    %98 = arith.mulf %79, %97 : vector<32x128xf32>
    %99 = vector.broadcast %96 : vector<32x1xf32> to vector<32x128xf32>
    %100 = arith.addf %98, %99 : vector<32x128xf32>
    %101 = tpu.transpose %100, [1, 0] : vector<32x128xf32> -> vector<128x32xf32>
    %102 = vector.extract_strided_slice %101 {offsets = [0, 0], sizes = [128, 4], strides = [1, 1]} : vector<128x32xf32> to vector<128x4xf32>
    %c0_37 = arith.constant 0 : index
    %c0_38 = arith.constant 0 : index
    %103 = vector.load %arg3[%c0_37, %c0_38] : memref<128x4xf32, #tpu.memory_space<vmem>>, vector<128x4xf32>
    tpu.vector_store %arg3[%c0_37, %c0_38], %102 {strides = array<i32>} : memref<128x4xf32, #tpu.memory_space<vmem>>, vector<128x4xf32>,
    return
  }
}

</mosaic_0001>

<llo_original>
// kernel: deep_characteristics_forward.1
$region0: #{deep_characteristics_forward.1}
  #allocation0 [shape = 'u32[]', space=smem, size = 0x4, offset = 0x4, fixed_abs, tag = 'smem constant byte address 0x4 - core index']
  #allocation1 [shape = 'u32[72,128]{1,0:T(1,128)}', space=vmem, size = 0x9000, scoped, tag = 'internal scratch']
  %s0 = inlined_call_operand.vmem [shape: f32[128,8], index: 0, kind: input, shape index: {}]
  %s1 = inlined_call_operand.vmem [shape: f32[3,32,32], index: 1, kind: input, shape index: {}]
  %s2 = inlined_call_operand.vmem [shape: f32[3,32,3], index: 2, kind: input, shape index: {}]
  %s3 = inlined_call_operand.vmem [shape: f32[128,4], index: 3, kind: output, shape index: {}]
  %s4 = sld [smem:[#allocation0]]
  $region22: #{deep_characteristics_forward.1} parent=0
    _
  %s6 = ssub.s32 1, %s4
  %s7 = scalar_select 0, %s6, %s4
  // Predicated region
  $region2: #{deep_characteristics_forward.1} parent=0 // pred_check
    _
  $region3: #{deep_characteristics_forward.1} parent=0 // pred_check_branch
    %9 = sbr.rel (0) target = $region5
  $region4: #{deep_characteristics_forward.1} parent=0 // pred_region
    _
  $region5: #{deep_characteristics_forward.1} parent=0 // pred_fallthru
    _
  // Predicated region
  $region6: #{deep_characteristics_forward.1} parent=0 // pred_check
    _
  $region7: #{deep_characteristics_forward.1} parent=0 // pred_check_branch
    %11 = sbr.rel (0) target = $region9
  $region8: #{deep_characteristics_forward.1} parent=0 // pred_region
    _
  $region9: #{deep_characteristics_forward.1} parent=0 // pred_fallthru
    _
  // Predicated region
  $region10: #{deep_characteristics_forward.1} parent=0 // pred_check
    _
  $region11: #{deep_characteristics_forward.1} parent=0 // pred_check_branch
    %13 = sbr.rel (0) target = $region13
  $region12: #{deep_characteristics_forward.1} parent=0 // pred_region
    _
  $region13: #{deep_characteristics_forward.1} parent=0 // pred_fallthru
    _
  %v14 = vld [vmem:[%s1] sm:$0xff]
  %v15 = vld [vmem:[%s1 + $0x8] sm:$0xff]
  %v16 = vld [vmem:[%s1 + $0x10] sm:$0xff]
  %v17 = vld [vmem:[%s1 + $0x18] sm:$0xff]
  %v18 = vld [vmem:[%s2] sm:$0xff]
  %v19 = vld [vmem:[%s2 + $0x8] sm:$0xff]
  %v20 = vld [vmem:[%s2 + $0x10] sm:$0xff]
  %v21 = vld [vmem:[%s2 + $0x18] sm:$0xff]
  %v22 = vld [vmem:[%s0] sm:$0xff]
  %v23 = vld [vmem:[%s0 + $0x8] sm:$0xff]
  %v24 = vld [vmem:[%s0 + $0x10] sm:$0xff]
  %v25 = vld [vmem:[%s0 + $0x18] sm:$0xff]
  %v26 = vld [vmem:[%s0 + $0x20] sm:$0xff]
  %v27 = vld [vmem:[%s0 + $0x28] sm:$0xff]
  %v28 = vld [vmem:[%s0 + $0x30] sm:$0xff]
  %v29 = vld [vmem:[%s0 + $0x38] sm:$0xff]
  %v30 = vld [vmem:[%s0 + $0x40] sm:$0xff]
  %v31 = vld [vmem:[%s0 + $0x48] sm:$0xff]
  %v32 = vld [vmem:[%s0 + $0x50] sm:$0xff]
  %v33 = vld [vmem:[%s0 + $0x58] sm:$0xff]
  %v34 = vld [vmem:[%s0 + $0x60] sm:$0xff]
  %v35 = vld [vmem:[%s0 + $0x68] sm:$0xff]
  %v36 = vld [vmem:[%s0 + $0x70] sm:$0xff]
  %v37 = vld [vmem:[%s0 + $0x78] sm:$0xff]
  %39 = vset.pattern.permute.xlu0 0
  %40 = vperm.xlu0 %39, %v18
  %v41 = vpop.permute.xlu0 %40
  %44 = vset.pattern.permute.xlu0 0
  %45 = vperm.xlu0 %44, %v19
  %v46 = vpop.permute.xlu0 %45
  %49 = vset.pattern.permute.xlu0 0
  %50 = vperm.xlu0 %49, %v20
  %v51 = vpop.permute.xlu0 %50
  %54 = vset.pattern.permute.xlu0 0
  %55 = vperm.xlu0 %54, %v21
  %v56 = vpop.permute.xlu0 %55
  %vm58 = vcmask 64512
  %v60 = vsel %vm58, %v14, 0
  %v63 = vsel %vm58, %v15, 0
  %v66 = vsel %vm58, %v16, 0
  %v69 = vsel %vm58, %v17, 0
  %v72 = vsel %vm58, %v22, 0
  %v75 = vsel %vm58, %v23, 0
  %v78 = vsel %vm58, %v24, 0
  %v81 = vsel %vm58, %v25, 0
  %v84 = vsel %vm58, %v26, 0
  %v87 = vsel %vm58, %v27, 0
  %v90 = vsel %vm58, %v28, 0
  %v93 = vsel %vm58, %v29, 0
  %v96 = vsel %vm58, %v30, 0
  %v99 = vsel %vm58, %v31, 0
  %v102 = vsel %vm58, %v32, 0
  %v105 = vsel %vm58, %v33, 0
  %v108 = vsel %vm58, %v34, 0
  %v111 = vsel %vm58, %v35, 0
  %v114 = vsel %vm58, %v36, 0
  %v117 = vsel %vm58, %v37, 0
  %119 = vmatpush.xpose.msra.mxu0 %v117
  %120 = vmatpush.xpose.msra.mxu0 %v114
  %121 = vmatpush.xpose.msra.mxu0 %v111
  %122 = vmatpush.xpose.msra.mxu0 %v108
  %123 = vmatpush.xpose.msra.mxu0 %v105
  %124 = vmatpush.xpose.msra.mxu0 %v102
  %125 = vmatpush.xpose.msra.mxu0 %v99
  %126 = vmatpush.xpose.msra.mxu0 %v96
  %127 = vmatpush.xpose.msra.mxu0 %v93
  %128 = vmatpush.xpose.msra.mxu0 %v90
  %129 = vmatpush.xpose.msra.mxu0 %v87
  %130 = vmatpush.xpose.msra.mxu0 %v84
  %131 = vmatpush.xpose.msra.mxu0 %v81
  %132 = vmatpush.xpose.msra.mxu0 %v78
  %133 = vmatpush.xpose.msra.mxu0 %v75
  %134 = vmatpush.xpose.msra.mxu0 %v72
  %135 = vmatmul.f32.gmra.mxu0 %v60
  %v136 = vpop.f32.mrf.mxu0
  %v137 = vadd.f32 %v41, %v136
  %138 = vmatmul.f32.gmra.mxu0 %v63
  %v139 = vpop.f32.mrf.mxu0
  %v140 = vadd.f32 %v46, %v139
  %141 = vmatmul.f32.gmra.mxu0 %v66
  %v142 = vpop.f32.mrf.mxu0
  %v143 = vadd.f32 %v51, %v142
  %144 = vmatmul.f32.gmra.mxu0 %v69
  %v145 = vpop.f32.mrf.mxu0
  %v146 = vadd.f32 %v56, %v145
  %147 = vdwg.mxu0
  %v148 = vmax.f32 %v137, 0.0
  %v149 = vmax.f32 %v140, 0.0
  %v150 = vmax.f32 %v143, 0.0
  %v151 = vmax.f32 %v146, 0.0
  %152 = vadd.xlane.f32.xlu0 %v148
  %v153 = vpop.xlane.xlu0 %152
  %154 = vadd.xlane.f32.xlu0 %v149
  %v155 = vpop.xlane.xlu0 %154
  %156 = vadd.xlane.f32.xlu0 %v150
  %v157 = vpop.xlane.xlu0 %156
  %158 = vadd.xlane.f32.xlu0 %v151
  %v159 = vpop.xlane.xlu0 %158
  %v160 = vmul.f32 %v148, %v148
  %v161 = vmul.f32 %v149, %v149
  %v162 = vmul.f32 %v150, %v150
  %v163 = vmul.f32 %v151, %v151
  %164 = vadd.xlane.f32.xlu0 %v160
  %v165 = vpop.xlane.xlu0 %164
  %166 = vadd.xlane.f32.xlu0 %v161
  %v167 = vpop.xlane.xlu0 %166
  %168 = vadd.xlane.f32.xlu0 %v162
  %v169 = vpop.xlane.xlu0 %168
  %170 = vadd.xlane.f32.xlu0 %v163
  %v171 = vpop.xlane.xlu0 %170
  %v172 = vmul.f32 %v153, 0.0078125
  %v173 = vmul.f32 %v155, 0.0078125
  %v174 = vmul.f32 %v157, 0.0078125
  %v175 = vmul.f32 %v159, 0.0078125
  %v176 = vmul.f32 %v165, 0.0078125
  %v177 = vmul.f32 %v167, 0.0078125
  %v178 = vmul.f32 %v169, 0.0078125
  %v179 = vmul.f32 %v171, 0.0078125
  %v180 = vmul.f32 %v172, %v172
  %v181 = vmul.f32 %v173, %v173
  %v182 = vmul.f32 %v174, %v174
  %v183 = vmul.f32 %v175, %v175
  %v184 = vsub.f32 %v176, %v180
  %v185 = vsub.f32 %v177, %v181
  %v186 = vsub.f32 %v178, %v182
  %v187 = vsub.f32 %v179, %v183
  %v188 = vadd.f32 %v184, 1e-05
  %v189 = vadd.f32 %v185, 1e-05
  %v190 = vadd.f32 %v186, 1e-05
  %v191 = vadd.f32 %v187, 1e-05
  %v192 = vrsqrt.pop %v188
  %v193 = vmul.f32 %v192, %v188
  %v194 = vmul.f32 %v193, %v192
  %v195 = vmul.f32 0.5, %v194
  %v196 = vsub.f32 1.5, %v195
  %v197 = vmul.f32 %v192, %v196
  %vm198 = vweird.f32 %v188
  %vm199 = vweird.f32 %v192
  %vm200 = vmor %vm198, %vm199
  %v201 = vsel %vm200, %v192, %v197
  %v202 = vrsqrt.pop %v189
  %v203 = vmul.f32 %v202, %v189
  %v204 = vmul.f32 %v203, %v202
  %v205 = vmul.f32 0.5, %v204
  %v206 = vsub.f32 1.5, %v205
  %v207 = vmul.f32 %v202, %v206
  %vm208 = vweird.f32 %v189
  %vm209 = vweird.f32 %v202
  %vm210 = vmor %vm208, %vm209
  %v211 = vsel %vm210, %v202, %v207
  %v212 = vrsqrt.pop %v190
  %v213 = vmul.f32 %v212, %v190
  %v214 = vmul.f32 %v213, %v212
  %v215 = vmul.f32 0.5, %v214
  %v216 = vsub.f32 1.5, %v215
  %v217 = vmul.f32 %v212, %v216
  %vm218 = vweird.f32 %v190
  %vm219 = vweird.f32 %v212
  %vm220 = vmor %vm218, %vm219
  %v221 = vsel %vm220, %v212, %v217
  %v222 = vrsqrt.pop %v191
  %v223 = vmul.f32 %v222, %v191
  %v224 = vmul.f32 %v223, %v222
  %v225 = vmul.f32 0.5, %v224
  %v226 = vsub.f32 1.5, %v225
  %v227 = vmul.f32 %v222, %v226
  %vm228 = vweird.f32 %v191
  %vm229 = vweird.f32 %v222
  %vm230 = vmor %vm228, %vm229
  %v231 = vsel %vm230, %v222, %v227
  %v232 = vmul.f32 %v201, %v18
  %v233 = vmul.f32 %v211, %v19
  %v234 = vmul.f32 %v221, %v20
  %v235 = vmul.f32 %v231, %v21
  %v236 = vmul.f32 %v172, %v232
  %v237 = vmul.f32 %v173, %v233
  %v238 = vmul.f32 %v174, %v234
  %v239 = vmul.f32 %v175, %v235
  %244 = vrot.lane.b32.xlu0 %v236, 1
  %v245 = vpop.permute.xlu0 %244
  %246 = vrot.lane.b32.xlu0 %v237, 1
  %v247 = vpop.permute.xlu0 %246
  %248 = vrot.lane.b32.xlu0 %v238, 1
  %v249 = vpop.permute.xlu0 %248
  %250 = vrot.lane.b32.xlu0 %v239, 1
  %v251 = vpop.permute.xlu0 %250
  %v256 = vsub.f32 %v18, %v245
  %v257 = vsub.f32 %v19, %v247
  %v258 = vsub.f32 %v20, %v249
  %v259 = vsub.f32 %v21, %v251
  %261 = vset.pattern.permute.xlu0 1
  %262 = vperm.xlu0 %261, %v232
  %v263 = vpop.permute.xlu0 %262
  %266 = vset.pattern.permute.xlu0 1
  %267 = vperm.xlu0 %266, %v233
  %v268 = vpop.permute.xlu0 %267
  %271 = vset.pattern.permute.xlu0 1
  %272 = vperm.xlu0 %271, %v234
  %v273 = vpop.permute.xlu0 %272
  %276 = vset.pattern.permute.xlu0 1
  %277 = vperm.xlu0 %276, %v235
  %v278 = vpop.permute.xlu0 %277
  %v280 = vmul.f32 %v148, %v263
  %v281 = vmul.f32 %v149, %v268
  %v282 = vmul.f32 %v150, %v273
  %v283 = vmul.f32 %v151, %v278
  %285 = vset.pattern.permute.xlu0 2
  %286 = vperm.xlu0 %285, %v256
  %v287 = vpop.permute.xlu0 %286
  %290 = vset.pattern.permute.xlu0 2
  %291 = vperm.xlu0 %290, %v257
  %v292 = vpop.permute.xlu0 %291
  %295 = vset.pattern.permute.xlu0 2
  %296 = vperm.xlu0 %295, %v258
  %v297 = vpop.permute.xlu0 %296
  %300 = vset.pattern.permute.xlu0 2
  %301 = vperm.xlu0 %300, %v259
  %v302 = vpop.permute.xlu0 %301
  %v304 = vadd.f32 %v280, %v287
  %v305 = vadd.f32 %v281, %v292
  %v306 = vadd.f32 %v282, %v297
  %v307 = vadd.f32 %v283, %v302
  %s308 = scalar_lea.vmem %s1, 32
  %v309 = vld [vmem:[%s308] sm:$0xff]
  %v310 = vld [vmem:[%s308 + $0x8] sm:$0xff]
  %v311 = vld [vmem:[%s308 + $0x10] sm:$0xff]
  %v312 = vld [vmem:[%s308 + $0x18] sm:$0xff]
  %s313 = scalar_lea.vmem %s2, 32
  %v314 = vld [vmem:[%s313] sm:$0xff]
  %v315 = vld [vmem:[%s313 + $0x8] sm:$0xff]
  %v316 = vld [vmem:[%s313 + $0x10] sm:$0xff]
  %v317 = vld [vmem:[%s313 + $0x18] sm:$0xff]
  %319 = vset.pattern.permute.xlu0 0
  %320 = vperm.xlu0 %319, %v314
  %v321 = vpop.permute.xlu0 %320
  %324 = vset.pattern.permute.xlu0 0
  %325 = vperm.xlu0 %324, %v315
  %v326 = vpop.permute.xlu0 %325
  %329 = vset.pattern.permute.xlu0 0
  %330 = vperm.xlu0 %329, %v316
  %v331 = vpop.permute.xlu0 %330
  %334 = vset.pattern.permute.xlu0 0
  %335 = vperm.xlu0 %334, %v317
  %v336 = vpop.permute.xlu0 %335
  %vm338 = vcmask 261120
  %v340 = vsel %vm338, %v309, 0
  %v343 = vsel %vm338, %v310, 0
  %v346 = vsel %vm338, %v311, 0
  %v349 = vsel %vm338, %v312, 0
  %351 = vmatpush.msra.mxu0 0.0
  %352 = vmatpush.msra.mxu0 0.0
  %353 = vmatpush.msra.mxu0 0.0
  %354 = vmatpush.msra.mxu0 0.0
  %355 = vmatpush.msra.mxu0 0.0
  %356 = vmatpush.msra.mxu0 0.0
  %357 = vmatpush.msra.mxu0 0.0
  %358 = vmatpush.msra.mxu0 0.0
  %359 = vmatpush.msra.mxu0 0.0
  %360 = vmatpush.msra.mxu0 0.0
  %361 = vmatpush.msra.mxu0 0.0
  %362 = vmatpush.msra.mxu0 0.0
  %363 = vmatpush.msra.mxu0 %v307
  %364 = vmatpush.msra.mxu0 %v306
  %365 = vmatpush.msra.mxu0 %v305
  %366 = vmatpush.msra.mxu0 %v304
  %367 = vmatmul.f32.gmra.mxu0 %v340
  %v368 = vpop.f32.mrf.mxu0
  %v369 = vadd.f32 %v321, %v368
  %370 = vmatmul.f32.gmra.mxu0 %v343
  %v371 = vpop.f32.mrf.mxu0
  %v372 = vadd.f32 %v326, %v371
  %373 = vmatmul.f32.gmra.mxu0 %v346
  %v374 = vpop.f32.mrf.mxu0
  %v375 = vadd.f32 %v331, %v374
  %376 = vmatmul.f32.gmra.mxu0 %v349
  %v377 = vpop.f32.mrf.mxu0
  %v378 = vadd.f32 %v336, %v377
  %379 = vdwg.mxu0
  %v380 = vmax.f32 %v369, 0.0
  %v381 = vmax.f32 %v372, 0.0
  %v382 = vmax.f32 %v375, 0.0
  %v383 = vmax.f32 %v378, 0.0
  %384 = vadd.xlane.f32.xlu0 %v380
  %v385 = vpop.xlane.xlu0 %384
  %386 = vadd.xlane.f32.xlu0 %v381
  %v387 = vpop.xlane.xlu0 %386
  %388 = vadd.xlane.f32.xlu0 %v382
  %v389 = vpop.xlane.xlu0 %388
  %390 = vadd.xlane.f32.xlu0 %v383
  %v391 = vpop.xlane.xlu0 %390
  %v392 = vmul.f32 %v380, %v380
  %v393 = vmul.f32 %v381, %v381
  %v394 = vmul.f32 %v382, %v382
  %v395 = vmul.f32 %v383, %v383
  %396 = vadd.xlane.f32.xlu0 %v392
  %v397 = vpop.xlane.xlu0 %396
  %398 = vadd.xlane.f32.xlu0 %v393
  %v399 = vpop.xlane.xlu0 %398
  %400 = vadd.xlane.f32.xlu0 %v394
  %v401 = vpop.xlane.xlu0 %400
  %402 = vadd.xlane.f32.xlu0 %v395
  %v403 = vpop.xlane.xlu0 %402
  %v404 = vmul.f32 %v385, 0.0078125
  %v405 = vmul.f32 %v387, 0.0078125
  %v406 = vmul.f32 %v389, 0.0078125
  %v407 = vmul.f32 %v391, 0.0078125
  %v408 = vmul.f32 %v397, 0.0078125
  %v409 = vmul.f32 %v399, 0.0078125
  %v410 = vmul.f32 %v401, 0.0078125
  %v411 = vmul.f32 %v403, 0.0078125
  %v412 = vmul.f32 %v404, %v404
  %v413 = vmul.f32 %v405, %v405
  %v414 = vmul.f32 %v406, %v406
  %v415 = vmul.f32 %v407, %v407
  %v416 = vsub.f32 %v408, %v412
  %v417 = vsub.f32 %v409, %v413
  %v418 = vsub.f32 %v410, %v414
  %v419 = vsub.f32 %v411, %v415
  %v420 = vadd.f32 %v416, 1e-05
  %v421 = vadd.f32 %v417, 1e-05
  %v422 = vadd.f32 %v418, 1e-05
  %v423 = vadd.f32 %v419, 1e-05
  %v424 = vrsqrt.pop %v420
  %v425 = vmul.f32 %v424, %v420
  %v426 = vmul.f32 %v425, %v424
  %v427 = vmul.f32 0.5, %v426
  %v428 = vsub.f32 1.5, %v427
  %v429 = vmul.f32 %v424, %v428
  %vm430 = vweird.f32 %v420
  %vm431 = vweird.f32 %v424
  %vm432 = vmor %vm430, %vm431
  %v433 = vsel %vm432, %v424, %v429
  %v434 = vrsqrt.pop %v421
  %v435 = vmul.f32 %v434, %v421
  %v436 = vmul.f32 %v435, %v434
  %v437 = vmul.f32 0.5, %v436
  %v438 = vsub.f32 1.5, %v437
  %v439 = vmul.f32 %v434, %v438
  %vm440 = vweird.f32 %v421
  %vm441 = vweird.f32 %v434
  %vm442 = vmor %vm440, %vm441
  %v443 = vsel %vm442, %v434, %v439
  %v444 = vrsqrt.pop %v422
  %v445 = vmul.f32 %v444, %v422
  %v446 = vmul.f32 %v445, %v444
  %v447 = vmul.f32 0.5, %v446
  %v448 = vsub.f32 1.5, %v447
  %v449 = vmul.f32 %v444, %v448
  %vm450 = vweird.f32 %v422
  %vm451 = vweird.f32 %v444
  %vm452 = vmor %vm450, %vm451
  %v453 = vsel %vm452, %v444, %v449
  %v454 = vrsqrt.pop %v423
  %v455 = vmul.f32 %v454, %v423
  %v456 = vmul.f32 %v455, %v454
  %v457 = vmul.f32 0.5, %v456
  %v458 = vsub.f32 1.5, %v457
  %v459 = vmul.f32 %v454, %v458
  %vm460 = vweird.f32 %v423
  %vm461 = vweird.f32 %v454
  %vm462 = vmor %vm460, %vm461
  %v463 = vsel %vm462, %v454, %v459
  %v464 = vmul.f32 %v433, %v314
  %v465 = vmul.f32 %v443, %v315
  %v466 = vmul.f32 %v453, %v316
  %v467 = vmul.f32 %v463, %v317
  %v468 = vmul.f32 %v404, %v464
  %v469 = vmul.f32 %v405, %v465
  %v470 = vmul.f32 %v406, %v466
  %v471 = vmul.f32 %v407, %v467
  %476 = vrot.lane.b32.xlu0 %v468, 1
  %v477 = vpop.permute.xlu0 %476
  %478 = vrot.lane.b32.xlu0 %v469, 1
  %v479 = vpop.permute.xlu0 %478
  %480 = vrot.lane.b32.xlu0 %v470, 1
  %v481 = vpop.permute.xlu0 %480
  %482 = vrot.lane.b32.xlu0 %v471, 1
  %v483 = vpop.permute.xlu0 %482
  %v488 = vsub.f32 %v314, %v477
  %v489 = vsub.f32 %v315, %v479
  %v490 = vsub.f32 %v316, %v481
  %v491 = vsub.f32 %v317, %v483
  %493 = vset.pattern.permute.xlu0 1
  %494 = vperm.xlu0 %493, %v464
  %v495 = vpop.permute.xlu0 %494
  %498 = vset.pattern.permute.xlu0 1
  %499 = vperm.xlu0 %498, %v465
  %v500 = vpop.permute.xlu0 %499
  %503 = vset.pattern.permute.xlu0 1
  %504 = vperm.xlu0 %503, %v466
  %v505 = vpop.permute.xlu0 %504
  %508 = vset.pattern.permute.xlu0 1
  %509 = vperm.xlu0 %508, %v467
  %v510 = vpop.permute.xlu0 %509
  %v512 = vmul.f32 %v380, %v495
  %v513 = vmul.f32 %v381, %v500
  %v514 = vmul.f32 %v382, %v505
  %v515 = vmul.f32 %v383, %v510
  %517 = vset.pattern.permute.xlu0 2
  %518 = vperm.xlu0 %517, %v488
  %v519 = vpop.permute.xlu0 %518
  %522 = vset.pattern.permute.xlu0 2
  %523 = vperm.xlu0 %522, %v489
  %v524 = vpop.permute.xlu0 %523
  %527 = vset.pattern.permute.xlu0 2
  %528 = vperm.xlu0 %527, %v490
  %v529 = vpop.permute.xlu0 %528
  %532 = vset.pattern.permute.xlu0 2
  %533 = vperm.xlu0 %532, %v491
  %v534 = vpop.permute.xlu0 %533
  %v536 = vadd.f32 %v512, %v519
  %v537 = vadd.f32 %v513, %v524
  %v538 = vadd.f32 %v514, %v529
  %v539 = vadd.f32 %v515, %v534
  %s540 = scalar_lea.vmem %s1, 64
  %v541 = vld [vmem:[%s540] sm:$0xff]
  %v542 = vld [vmem:[%s540 + $0x8] sm:$0xff]
  %v543 = vld [vmem:[%s540 + $0x10] sm:$0xff]
  %v544 = vld [vmem:[%s540 + $0x18] sm:$0xff]
  %s545 = scalar_lea.vmem %s2, 64
  %v546 = vld [vmem:[%s545] sm:$0xff]
  %v547 = vld [vmem:[%s545 + $0x8] sm:$0xff]
  %v548 = vld [vmem:[%s545 + $0x10] sm:$0xff]
  %v549 = vld [vmem:[%s545 + $0x18] sm:$0xff]
  %551 = vset.pattern.permute.xlu0 0
  %552 = vperm.xlu0 %551, %v546
  %v553 = vpop.permute.xlu0 %552
  %556 = vset.pattern.permute.xlu0 0
  %557 = vperm.xlu0 %556, %v547
  %v558 = vpop.permute.xlu0 %557
  %561 = vset.pattern.permute.xlu0 0
  %562 = vperm.xlu0 %561, %v548
  %v563 = vpop.permute.xlu0 %562
  %566 = vset.pattern.permute.xlu0 0
  %567 = vperm.xlu0 %566, %v549
  %v568 = vpop.permute.xlu0 %567
  %v571 = vsel %vm338, %v541, 0
  %v574 = vsel %vm338, %v542, 0
  %v577 = vsel %vm338, %v543, 0
  %v580 = vsel %vm338, %v544, 0
  %582 = vmatpush.msra.mxu0 0.0
  %583 = vmatpush.msra.mxu0 0.0
  %584 = vmatpush.msra.mxu0 0.0
  %585 = vmatpush.msra.mxu0 0.0
  %586 = vmatpush.msra.mxu0 0.0
  %587 = vmatpush.msra.mxu0 0.0
  %588 = vmatpush.msra.mxu0 0.0
  %589 = vmatpush.msra.mxu0 0.0
  %590 = vmatpush.msra.mxu0 0.0
  %591 = vmatpush.msra.mxu0 0.0
  %592 = vmatpush.msra.mxu0 0.0
  %593 = vmatpush.msra.mxu0 0.0
  %594 = vmatpush.msra.mxu0 %v539
  %595 = vmatpush.msra.mxu0 %v538
  %596 = vmatpush.msra.mxu0 %v537
  %597 = vmatpush.msra.mxu0 %v536
  %598 = vmatmul.f32.gmra.mxu0 %v571
  %v599 = vpop.f32.mrf.mxu0
  %v600 = vadd.f32 %v553, %v599
  %601 = vmatmul.f32.gmra.mxu0 %v574
  %v602 = vpop.f32.mrf.mxu0
  %v603 = vadd.f32 %v558, %v602
  %604 = vmatmul.f32.gmra.mxu0 %v577
  %v605 = vpop.f32.mrf.mxu0
  %v606 = vadd.f32 %v563, %v605
  %607 = vmatmul.f32.gmra.mxu0 %v580
  %v608 = vpop.f32.mrf.mxu0
  %v609 = vadd.f32 %v568, %v608
  %610 = vdwg.mxu0
  %v611 = vmax.f32 %v600, 0.0
  %v612 = vmax.f32 %v603, 0.0
  %v613 = vmax.f32 %v606, 0.0
  %v614 = vmax.f32 %v609, 0.0
  %615 = vadd.xlane.f32.xlu0 %v611
  %v616 = vpop.xlane.xlu0 %615
  %617 = vadd.xlane.f32.xlu0 %v612
  %v618 = vpop.xlane.xlu0 %617
  %619 = vadd.xlane.f32.xlu0 %v613
  %v620 = vpop.xlane.xlu0 %619
  %621 = vadd.xlane.f32.xlu0 %v614
  %v622 = vpop.xlane.xlu0 %621
  %v623 = vmul.f32 %v611, %v611
  %v624 = vmul.f32 %v612, %v612
  %v625 = vmul.f32 %v613, %v613
  %v626 = vmul.f32 %v614, %v614
  %627 = vadd.xlane.f32.xlu0 %v623
  %v628 = vpop.xlane.xlu0 %627
  %629 = vadd.xlane.f32.xlu0 %v624
  %v630 = vpop.xlane.xlu0 %629
  %631 = vadd.xlane.f32.xlu0 %v625
  %v632 = vpop.xlane.xlu0 %631
  %633 = vadd.xlane.f32.xlu0 %v626
  %v634 = vpop.xlane.xlu0 %633
  %v635 = vmul.f32 %v616, 0.0078125
  %v636 = vmul.f32 %v618, 0.0078125
  %v637 = vmul.f32 %v620, 0.0078125
  %v638 = vmul.f32 %v622, 0.0078125
  %v639 = vmul.f32 %v628, 0.0078125
  %v640 = vmul.f32 %v630, 0.0078125
  %v641 = vmul.f32 %v632, 0.0078125
  %v642 = vmul.f32 %v634, 0.0078125
  %v643 = vmul.f32 %v635, %v635
  %v644 = vmul.f32 %v636, %v636
  %v645 = vmul.f32 %v637, %v637
  %v646 = vmul.f32 %v638, %v638
  %v647 = vsub.f32 %v639, %v643
  %v648 = vsub.f32 %v640, %v644
  %v649 = vsub.f32 %v641, %v645
  %v650 = vsub.f32 %v642, %v646
  %v651 = vadd.f32 %v647, 1e-05
  %v652 = vadd.f32 %v648, 1e-05
  %v653 = vadd.f32 %v649, 1e-05
  %v654 = vadd.f32 %v650, 1e-05
  %v655 = vrsqrt.pop %v651
  %v656 = vmul.f32 %v655, %v651
  %v657 = vmul.f32 %v656, %v655
  %v658 = vmul.f32 0.5, %v657
  %v659 = vsub.f32 1.5, %v658
  %v660 = vmul.f32 %v655, %v659
  %vm661 = vweird.f32 %v651
  %vm662 = vweird.f32 %v655
  %vm663 = vmor %vm661, %vm662
  %v664 = vsel %vm663, %v655, %v660
  %v665 = vrsqrt.pop %v652
  %v666 = vmul.f32 %v665, %v652
  %v667 = vmul.f32 %v666, %v665
  %v668 = vmul.f32 0.5, %v667
  %v669 = vsub.f32 1.5, %v668
  %v670 = vmul.f32 %v665, %v669
  %vm671 = vweird.f32 %v652
  %vm672 = vweird.f32 %v665
  %vm673 = vmor %vm671, %vm672
  %v674 = vsel %vm673, %v665, %v670
  %v675 = vrsqrt.pop %v653
  %v676 = vmul.f32 %v675, %v653
  %v677 = vmul.f32 %v676, %v675
  %v678 = vmul.f32 0.5, %v677
  %v679 = vsub.f32 1.5, %v678
  %v680 = vmul.f32 %v675, %v679
  %vm681 = vweird.f32 %v653
  %vm682 = vweird.f32 %v675
  %vm683 = vmor %vm681, %vm682
  %v684 = vsel %vm683, %v675, %v680
  %v685 = vrsqrt.pop %v654
  %v686 = vmul.f32 %v685, %v654
  %v687 = vmul.f32 %v686, %v685
  %v688 = vmul.f32 0.5, %v687
  %v689 = vsub.f32 1.5, %v688
  %v690 = vmul.f32 %v685, %v689
  %vm691 = vweird.f32 %v654
  %vm692 = vweird.f32 %v685
  %vm693 = vmor %vm691, %vm692
  %v694 = vsel %vm693, %v685, %v690
  %v695 = vmul.f32 %v664, %v546
  %v696 = vmul.f32 %v674, %v547
  %v697 = vmul.f32 %v684, %v548
  %v698 = vmul.f32 %v694, %v549
  %v699 = vmul.f32 %v635, %v695
  %v700 = vmul.f32 %v636, %v696
  %v701 = vmul.f32 %v637, %v697
  %v702 = vmul.f32 %v638, %v698
  %707 = vrot.lane.b32.xlu0 %v699, 1
  %v708 = vpop.permute.xlu0 %707
  %709 = vrot.lane.b32.xlu0 %v700, 1
  %v710 = vpop.permute.xlu0 %709
  %711 = vrot.lane.b32.xlu0 %v701, 1
  %v712 = vpop.permute.xlu0 %711
  %713 = vrot.lane.b32.xlu0 %v702, 1
  %v714 = vpop.permute.xlu0 %713
  %v719 = vsub.f32 %v546, %v708
  %v720 = vsub.f32 %v547, %v710
  %v721 = vsub.f32 %v548, %v712
  %v722 = vsub.f32 %v549, %v714
  %724 = vset.pattern.permute.xlu0 1
  %725 = vperm.xlu0 %724, %v695
  %v726 = vpop.permute.xlu0 %725
  %729 = vset.pattern.permute.xlu0 1
  %730 = vperm.xlu0 %729, %v696
  %v731 = vpop.permute.xlu0 %730
  %734 = vset.pattern.permute.xlu0 1
  %735 = vperm.xlu0 %734, %v697
  %v736 = vpop.permute.xlu0 %735
  %739 = vset.pattern.permute.xlu0 1
  %740 = vperm.xlu0 %739, %v698
  %v741 = vpop.permute.xlu0 %740
  %v743 = vmul.f32 %v611, %v726
  %v744 = vmul.f32 %v612, %v731
  %v745 = vmul.f32 %v613, %v736
  %v746 = vmul.f32 %v614, %v741
  %748 = vset.pattern.permute.xlu0 2
  %749 = vperm.xlu0 %748, %v719
  %v750 = vpop.permute.xlu0 %749
  %753 = vset.pattern.permute.xlu0 2
  %754 = vperm.xlu0 %753, %v720
  %v755 = vpop.permute.xlu0 %754
  %758 = vset.pattern.permute.xlu0 2
  %759 = vperm.xlu0 %758, %v721
  %v760 = vpop.permute.xlu0 %759
  %763 = vset.pattern.permute.xlu0 2
  %764 = vperm.xlu0 %763, %v722
  %v765 = vpop.permute.xlu0 %764
  %v767 = vadd.f32 %v743, %v750
  %v768 = vadd.f32 %v744, %v755
  %v769 = vadd.f32 %v745, %v760
  %v770 = vadd.f32 %v746, %v765
  %771 = vxpose.xlu0.b32.start [1/16] %v767, 128
  %772 = vxpose.xlu0.b32.cont [2/16] %v768, 128
  %773 = vxpose.xlu0.b32.cont [3/16] %v769, 128
  %774 = vxpose.xlu0.b32.cont [4/16] %v770, 128
  %775 = vxpose.xlu0.b32.cont [5/16] 0.0, 128
  %776 = vxpose.xlu0.b32.cont [6/16] 0.0, 128
  %777 = vxpose.xlu0.b32.cont [7/16] 0.0, 128
  %778 = vxpose.xlu0.b32.cont [8/16] 0.0, 128
  %779 = vxpose.xlu0.b32.cont [9/16] 0.0, 128
  %780 = vxpose.xlu0.b32.cont [10/16] 0.0, 128
  %781 = vxpose.xlu0.b32.cont [11/16] 0.0, 128
  %782 = vxpose.xlu0.b32.cont [12/16] 0.0, 128
  %783 = vxpose.xlu0.b32.cont [13/16] 0.0, 128
  %784 = vxpose.xlu0.b32.cont [14/16] 0.0, 128
  %785 = vxpose.xlu0.b32.cont [15/16] 0.0, 128
  %786 = vxpose.xlu0.b32.end [16/16] 0.0, 128
  %v787 = vpop.trf.xlu0
  %v788 = vpop.trf.xlu0
  %v789 = vpop.trf.xlu0
  %v790 = vpop.trf.xlu0
  %v791 = vpop.trf.xlu0
  %v792 = vpop.trf.xlu0
  %v793 = vpop.trf.xlu0
  %v794 = vpop.trf.xlu0
  %v795 = vpop.trf.xlu0
  %v796 = vpop.trf.xlu0
  %v797 = vpop.trf.xlu0
  %v798 = vpop.trf.xlu0
  %v799 = vpop.trf.xlu0
  %v800 = vpop.trf.xlu0
  %v801 = vpop.trf.xlu0
  %v802 = vpop.trf.xlu0
  %vm803 = vcmask 31744
  %804 = vst.msk [vmem:[%s3] sm:$0xff] %vm803, %v787
  %805 = vst.msk [vmem:[%s3 + $0x8] sm:$0xff] %vm803, %v788
  %806 = vst.msk [vmem:[%s3 + $0x10] sm:$0xff] %vm803, %v789
  %807 = vst.msk [vmem:[%s3 + $0x18] sm:$0xff] %vm803, %v790
  %808 = vst.msk [vmem:[%s3 + $0x20] sm:$0xff] %vm803, %v791
  %809 = vst.msk [vmem:[%s3 + $0x28] sm:$0xff] %vm803, %v792
  %810 = vst.msk [vmem:[%s3 + $0x30] sm:$0xff] %vm803, %v793
  %811 = vst.msk [vmem:[%s3 + $0x38] sm:$0xff] %vm803, %v794
  %812 = vst.msk [vmem:[%s3 + $0x40] sm:$0xff] %vm803, %v795
  %813 = vst.msk [vmem:[%s3 + $0x48] sm:$0xff] %vm803, %v796
  %814 = vst.msk [vmem:[%s3 + $0x50] sm:$0xff] %vm803, %v797
  %815 = vst.msk [vmem:[%s3 + $0x58] sm:$0xff] %vm803, %v798
  %816 = vst.msk [vmem:[%s3 + $0x60] sm:$0xff] %vm803, %v799
  %817 = vst.msk [vmem:[%s3 + $0x68] sm:$0xff] %vm803, %v800
  %818 = vst.msk [vmem:[%s3 + $0x70] sm:$0xff] %vm803, %v801
  %819 = vst.msk [vmem:[%s3 + $0x78] sm:$0xff] %vm803, %v802
  // Predicated region
  $region14: #{deep_characteristics_forward.1} parent=0 // pred_check
    _
  $region15: #{deep_characteristics_forward.1} parent=0 // pred_check_branch
    %821 = sbr.rel (0) target = $region17
  $region16: #{deep_characteristics_forward.1} parent=0 // pred_region
    _
  $region17: #{deep_characteristics_forward.1} parent=0 // pred_fallthru
    _
  // Predicated region
  $region18: #{deep_characteristics_forward.1} parent=0 // pred_check
    _
  $region19: #{deep_characteristics_forward.1} parent=0 // pred_check_branch
    %823 = sbr.rel (0) target = $region21
  $region20: #{deep_characteristics_forward.1} parent=0 // pred_region
    _
  $region21: #{deep_characteristics_forward.1} parent=0 // pred_fallthru
    _

</llo_original>
